<compile_context>
chip_gen: v7x
topology: tpu7x:2x2x1
jax: 0.10.0
libtpu: 0.0.40
codegen_flags: <defaults>
</compile_context>

<pallas_src>
import math

import jax
import jax.numpy as jnp
from jax.experimental import pallas as pl
from jax.experimental.pallas import tpu as pltpu


_LANE = 128                              # vreg lane width
_SUBLANE = 8
_ADJ_VMEM_BUDGET = 24 * 1024 * 1024      # bytes for the double-buffered adj row tiles
_VMEM_LIMIT = 48 * 1024 * 1024           # safe on v5e/v6e (128 MiB) and v7x (64 MiB)


def _gcn_kernel_bias(x_ref, w_ref, b_ref, adj_ref, o_ref):
    # support = X @ W (X, W, bias are full-resident blocks; no re-DMA across tiles)
    support = jnp.dot(x_ref[...], w_ref[...], preferred_element_type=jnp.float32)
    # out_tile = adj_tile @ support  (MXU, f32 accumulate)
    out = jnp.dot(adj_ref[...], support.astype(adj_ref.dtype),
                  preferred_element_type=jnp.float32)
    o_ref[...] = (out + b_ref[...].astype(jnp.float32)).astype(o_ref.dtype)


def _gcn_kernel_nobias(x_ref, w_ref, adj_ref, o_ref):
    support = jnp.dot(x_ref[...], w_ref[...], preferred_element_type=jnp.float32)
    out = jnp.dot(adj_ref[...], support.astype(adj_ref.dtype),
                  preferred_element_type=jnp.float32)
    o_ref[...] = out.astype(o_ref.dtype)


def _round_up(v, m):
    return ((v + m - 1) // m) * m


def _choose_row_tile(n_rows, n_cols, itemsize):
    # adj row tiles are double-buffered by the Pallas pipeline:
    #   2 * TM * N * itemsize <= _ADJ_VMEM_BUDGET
    tm = _ADJ_VMEM_BUDGET // max(1, 2 * n_cols * itemsize)
    tm = (tm // _SUBLANE) * _SUBLANE
    tm = max(_SUBLANE, min(tm, 1024))
    return n_rows if tm >= n_rows else tm


def graph_convolution(x, adj, weight, bias=None):
    """GCN layer forward: adj @ (x @ weight) [+ bias].

    x:      [N, F_in]    node features (f32 or bf16 — passed through unchanged)
    adj:    [N, N]       dense adjacency (dominant HBM traffic)
    weight: [F_in, F_out]
    bias:   [F_out] or None
    returns [N, F_out]   float32
    """
    N, F_in = x.shape
    F_in_w, F_out = weight.shape
    assert F_in_w == F_in and adj.shape == (N, N)

    # Lane-dense output: pad F_out up to a multiple of 128, slice padding after.
    F_pad = _round_up(F_out, _LANE)
    if F_pad != F_out:
        weight = jnp.pad(weight, ((0, 0), (0, F_pad - F_out)))
        if bias is not None:
            bias = jnp.pad(bias, (0, F_pad - F_out))

    TM = _choose_row_tile(N, N, adj.dtype.itemsize)
    grid = (pl.cdiv(N, TM),)

    x_spec = pl.BlockSpec((N, F_in), lambda i: (0, 0))      # resident across tiles
    w_spec = pl.BlockSpec((F_in, F_pad), lambda i: (0, 0))   # resident across tiles
    # Sweep pipeline_mode=pl.Buffered(3) here if adj DMA is still exposed.
    adj_spec = pl.BlockSpec((TM, N), lambda i: (i, 0))
    out_spec = pl.BlockSpec((TM, F_pad), lambda i: (i, 0))

    num_tiles = grid[0]
    flops = num_tiles * 2 * N * F_in * F_pad + 2 * N * N * F_pad
    bytes_accessed = (adj.size * adj.dtype.itemsize
                      + x.size * x.dtype.itemsize
                      + F_in * F_pad * weight.dtype.itemsize
                      + N * F_pad * 4)
    cost = pl.CostEstimate(flops=flops, transcendentals=0,
                           bytes_accessed=bytes_accessed)

    compiler_params = pltpu.CompilerParams(
        dimension_semantics=("parallel",),   # v7x: shard row tiles across both TCs
        vmem_limit_bytes=_VMEM_LIMIT,
    )

    if bias is not None:
        b2d = bias.reshape(1, F_pad)
        out = pl.pallas_call(
            _gcn_kernel_bias,
            out_shape=jax.ShapeDtypeStruct((N, F_pad), jnp.float32),
            grid_spec=pl.GridSpec(
                grid=grid,
                in_specs=[x_spec, w_spec,
                          pl.BlockSpec((1, F_pad), lambda i: (0, 0)),
                          adj_spec],
                out_specs=out_spec,
            ),
            compiler_params=compiler_params,
            cost_estimate=cost,
        )(x, weight, b2d, adj)
    else:
        out = pl.pallas_call(
            _gcn_kernel_nobias,
            out_shape=jax.ShapeDtypeStruct((N, F_pad), jnp.float32),
            grid_spec=pl.GridSpec(
                grid=grid,
                in_specs=[x_spec, w_spec, adj_spec],
                out_specs=out_spec,
            ),
            compiler_params=compiler_params,
            cost_estimate=cost,
        )(x, weight, adj)

    if F_pad != F_out:
        out = out[:, :F_out]
    return out


if __name__ == "__main__":
    # Small shapes consistent with the module: N = num_points nodes, F_in -> F_out.
    N, F_in, F_out = 128, 64, 32

    key = jax.random.PRNGKey(0)
    k_x, k_a, k_w, k_b = jax.random.split(key, 4)

    # Deterministic parameter init mirroring reset_parameters():
    # uniform(-stdv, stdv), stdv = 1/sqrt(out_features)
    stdv = 1.0 / math.sqrt(F_out)
    weight = jax.random.uniform(k_w, (F_in, F_out), minval=-stdv, maxval=stdv,
                                dtype=jnp.float32)
    bias = jax.random.uniform(k_b, (F_out,), minval=-stdv, maxval=stdv,
                              dtype=jnp.float32)

    # Example inputs: node features and a dense, row-normalized adjacency.
    x = jax.random.normal(k_x, (N, F_in), dtype=jnp.float32)
    adj_raw = jax.random.uniform(k_a, (N, N), dtype=jnp.float32)
    row_sum = jnp.maximum(jnp.sum(adj_raw, axis=1, keepdims=True), 1e-6)
    adj = adj_raw / row_sum

    # With bias.
    out = jax.block_until_ready(graph_convolution(x, adj, weight, bias))
    ref = adj @ (x @ weight) + bias[None, :]
    assert out.shape == (N, F_out)
    assert jnp.allclose(out, ref, atol=1e-4, rtol=1e-4)

    # bias=None path (no bias DMA / add inside the kernel).
    out_nb = jax.block_until_ready(graph_convolution(x, adj, weight, None))
    ref_nb = adj @ (x @ weight)
    assert jnp.allclose(out_nb, ref_nb, atol=1e-4, rtol=1e-4)

    print("KERNEL_OK")
</pallas_src>

<mosaic_0001>
module attributes {stable_mosaic.version = 11 : i64} {
  func.func @_gcn_kernel_bias(%arg0: i32, %arg1: memref<128x64xf32, #tpu.memory_space<vmem>>, %arg2: memref<64x128xf32, #tpu.memory_space<vmem>>, %arg3: memref<1x128xf32, #tpu.memory_space<vmem>>, %arg4: memref<128x128xf32, #tpu.memory_space<vmem>>, %arg5: memref<128x128xf32, #tpu.memory_space<vmem>>) attributes {dimension_semantics = [#tpu.dimension_semantics<parallel>], iteration_bounds = array<i64: 1>, scalar_prefetch = 0 : i64, scratch_operands = 0 : i64, tpu.core_type = #tpu.core_type<tc>, window_params = [{pipeline_mode = #tpu.pipeline_mode<synchronous>, transform_indices = @transform_0, window_bounds = array<i64: 128, 64>}, {pipeline_mode = #tpu.pipeline_mode<synchronous>, transform_indices = @transform_1, window_bounds = array<i64: 64, 128>}, {pipeline_mode = #tpu.pipeline_mode<synchronous>, transform_indices = @transform_2, window_bounds = array<i64: 1, 128>}, {transform_indices = @transform_3, window_bounds = array<i64: 128, 128>}, {transform_indices = @transform_4, window_bounds = array<i64: 128, 128>}]} {
    %c0 = arith.constant 0 : index
    %c0_0 = arith.constant 0 : index
    %0 = vector.load %arg1[%c0, %c0_0] : memref<128x64xf32, #tpu.memory_space<vmem>>, vector<128x64xf32>
    %c0_1 = arith.constant 0 : index
    %c0_2 = arith.constant 0 : index
    %1 = vector.load %arg2[%c0_1, %c0_2] : memref<64x128xf32, #tpu.memory_space<vmem>>, vector<64x128xf32>
    %cst = arith.constant dense<0.000000e+00> : vector<128x128xf32>
    %2 = tpu.matmul %0, %1, %cst {dimension_numbers = #tpu.dot_dimension_numbers<[1], [0], [0], [1], [0, 0, 1, 1], [], []>} : vector<128x64xf32>, vector<64x128xf32>, vector<128x128xf32> -> vector<128x128xf32>
    %c0_3 = arith.constant 0 : index
    %c0_4 = arith.constant 0 : index
    %3 = vector.load %arg4[%c0_3, %c0_4] : memref<128x128xf32, #tpu.memory_space<vmem>>, vector<128x128xf32>
    %cst_5 = arith.constant dense<0.000000e+00> : vector<128x128xf32>
    %4 = tpu.matmul %3, %2, %cst_5 {dimension_numbers = #tpu.dot_dimension_numbers<[1], [0], [0], [1], [0, 0, 1, 1], [], []>} : vector<128x128xf32>, vector<128x128xf32>, vector<128x128xf32> -> vector<128x128xf32>
    %c0_6 = arith.constant 0 : index
    %c0_7 = arith.constant 0 : index
    %5 = vector.load %arg3[%c0_6, %c0_7] : memref<1x128xf32, #tpu.memory_space<vmem>>, vector<1x128xf32>
    %6 = vector.broadcast %5 : vector<1x128xf32> to vector<128x128xf32>
    %7 = arith.addf %4, %6 : vector<128x128xf32>
    %c0_8 = arith.constant 0 : index
    %c0_9 = arith.constant 0 : index
    %8 = vector.load %arg5[%c0_8, %c0_9] : memref<128x128xf32, #tpu.memory_space<vmem>>, vector<128x128xf32>
    tpu.vector_store %arg5[%c0_8, %c0_9], %7 {strides = array<i32>} : memref<128x128xf32, #tpu.memory_space<vmem>>, vector<128x128xf32>,
    return
  }
  func.func @transform_0(%arg0: i32) -> (i32, i32) {
    %c0_i32 = arith.constant 0 : i32
    %c0_i32_0 = arith.constant 0 : i32
    %c0_i32_1 = arith.constant 0 : i32
    return %c0_i32, %c0_i32_0 : i32, i32
  }
  func.func @transform_1(%arg0: i32) -> (i32, i32) {
    %c0_i32 = arith.constant 0 : i32
    %c0_i32_0 = arith.constant 0 : i32
    %c0_i32_1 = arith.constant 0 : i32
    return %c0_i32, %c0_i32_0 : i32, i32
  }
  func.func @transform_2(%arg0: i32) -> (i32, i32) {
    %c0_i32 = arith.constant 0 : i32
    %c0_i32_0 = arith.constant 0 : i32
    %c0_i32_1 = arith.constant 0 : i32
    return %c0_i32, %c0_i32_0 : i32, i32
  }
  func.func @transform_3(%arg0: i32) -> (i32, i32) {
    %c0_i32 = arith.constant 0 : i32
    %c0_i32_0 = arith.constant 0 : i32
    return %arg0, %c0_i32 : i32, i32
  }
  func.func @transform_4(%arg0: i32) -> (i32, i32) {
    %c0_i32 = arith.constant 0 : i32
    %c0_i32_0 = arith.constant 0 : i32
    return %arg0, %c0_i32 : i32, i32
  }
}

</mosaic_0001>

<llo_original>
// kernel: tpu_custom_call.1
$region0: #{tpu_custom_call.1}
  #allocation0 [shape = 'u32[]', space=smem, size = 0x4, offset = 0x4, fixed_abs, tag = 'smem constant byte address 0x4 - core index']
  #allocation1 [shape = 'u32[144,128]{1,0:T(1,128)}', space=vmem, size = 0x12000, scoped, tag = 'internal scratch']
  %s0 = inlined_call_operand.vmem [shape: f32[128,64], index: 0, kind: input, shape index: {}]
  %s1 = inlined_call_operand.vmem [shape: f32[64,128], index: 1, kind: input, shape index: {}]
  %s2 = inlined_call_operand.vmem [shape: f32[1,128], index: 2, kind: input, shape index: {}]
  %s3 = inlined_call_operand.vmem [shape: f32[128,128], index: 3, kind: input, shape index: {}]
  %s4 = inlined_call_operand.hbm [shape: f32[128,128], index: 4, kind: output, shape index: {}]
  %s5 = sld [smem:[#allocation0]]
  $region26: #{tpu_custom_call.1} parent=0
    _
  %s7 = ssub.s32 1, %s5
  %s8 = scalar_select 0, %s7, %s5
  $region1: #{tpu_custom_call.1} parent=0
    #allocation2 [shape = 'u8[65536]{0}', space=vmem, size = 0x10000, scoped, tag = 'output window, operand 0, single buffered']
    #allocation3 [shape = 's32[1]{0}', space=sflag, size = 0x4, scoped, tag = 'scoped memory for tpu_custom_call.1']
    %9 = vsyncpa [#allocation3], 0
    // Predicated region
    $region2: #{tpu_custom_call.1} parent=1 // pred_check
      _
    $region3: #{tpu_custom_call.1} parent=1 // pred_check_branch
      %11 = sbr.rel (0) target = $region5
    $region4: #{tpu_custom_call.1} parent=1 // pred_region
      _
    $region5: #{tpu_custom_call.1} parent=1 // pred_fallthru
      _
    // Predicated region
    $region6: #{tpu_custom_call.1} parent=1 // pred_check
      _
    $region7: #{tpu_custom_call.1} parent=1 // pred_check_branch
      %13 = sbr.rel (0) target = $region9
    $region8: #{tpu_custom_call.1} parent=1 // pred_region
      _
    $region9: #{tpu_custom_call.1} parent=1 // pred_fallthru
      _
    // Predicated region
    $region10: #{tpu_custom_call.1} parent=1 // pred_check
      _
    $region11: #{tpu_custom_call.1} parent=1 // pred_check_branch
      %15 = sbr.rel (0) target = $region13
    $region12: #{tpu_custom_call.1} parent=1 // pred_region
      _
    $region13: #{tpu_custom_call.1} parent=1 // pred_fallthru
      _
    // Predicated region
    $region14: #{tpu_custom_call.1} parent=1 // pred_check
      _
    $region15: #{tpu_custom_call.1} parent=1 // pred_check_branch
      %17 = sbr.rel (0) target = $region17
    $region16: #{tpu_custom_call.1} parent=1 // pred_region
      _
    $region17: #{tpu_custom_call.1} parent=1 // pred_fallthru
      _
    %v18 = vld [vmem:[%s0] sm:$0xff]
    %v19 = vld [vmem:[%s0 + $0x8] sm:$0xff]
    %v20 = vld [vmem:[%s0 + $0x10] sm:$0xff]
    %v21 = vld [vmem:[%s0 + $0x18] sm:$0xff]
    %v22 = vld [vmem:[%s0 + $0x20] sm:$0xff]
    %v23 = vld [vmem:[%s0 + $0x28] sm:$0xff]
    %v24 = vld [vmem:[%s0 + $0x30] sm:$0xff]
    %v25 = vld [vmem:[%s0 + $0x38] sm:$0xff]
    %v26 = vld [vmem:[%s0 + $0x40] sm:$0xff]
    %v27 = vld [vmem:[%s0 + $0x48] sm:$0xff]
    %v28 = vld [vmem:[%s0 + $0x50] sm:$0xff]
    %v29 = vld [vmem:[%s0 + $0x58] sm:$0xff]
    %v30 = vld [vmem:[%s0 + $0x60] sm:$0xff]
    %v31 = vld [vmem:[%s0 + $0x68] sm:$0xff]
    %v32 = vld [vmem:[%s0 + $0x70] sm:$0xff]
    %v33 = vld [vmem:[%s0 + $0x78] sm:$0xff]
    %v34 = vld [vmem:[%s1] sm:$0xff]
    %v35 = vld [vmem:[%s1 + $0x8] sm:$0xff]
    %v36 = vld [vmem:[%s1 + $0x10] sm:$0xff]
    %v37 = vld [vmem:[%s1 + $0x18] sm:$0xff]
    %v38 = vld [vmem:[%s1 + $0x20] sm:$0xff]
    %v39 = vld [vmem:[%s1 + $0x28] sm:$0xff]
    %v40 = vld [vmem:[%s1 + $0x30] sm:$0xff]
    %v41 = vld [vmem:[%s1 + $0x38] sm:$0xff]
    %vm42 = vcmask 523264
    %v44 = vsel %vm42, %v18, 0
    %v47 = vsel %vm42, %v19, 0
    %v50 = vsel %vm42, %v20, 0
    %v53 = vsel %vm42, %v21, 0
    %v56 = vsel %vm42, %v22, 0
    %v59 = vsel %vm42, %v23, 0
    %v62 = vsel %vm42, %v24, 0
    %v65 = vsel %vm42, %v25, 0
    %v68 = vsel %vm42, %v26, 0
    %v71 = vsel %vm42, %v27, 0
    %v74 = vsel %vm42, %v28, 0
    %v77 = vsel %vm42, %v29, 0
    %v80 = vsel %vm42, %v30, 0
    %v83 = vsel %vm42, %v31, 0
    %v86 = vsel %vm42, %v32, 0
    %v89 = vsel %vm42, %v33, 0
    %91 = vmatprep.subr.mxu0 0.0
    %92 = vmatpush1.msra.mxu0 %v34
    %93 = vmatprep.subr.mxu0 0.0
    %94 = vmatpush1.msra.mxu0 %v35
    %95 = vmatprep.subr.mxu0 0.0
    %96 = vmatpush1.msra.mxu0 %v36
    %97 = vmatprep.subr.mxu0 0.0
    %98 = vmatpush1.msra.mxu0 %v37
    %99 = vmatprep.subr.mxu0 0.0
    %100 = vmatpush1.msra.mxu0 %v38
    %101 = vmatprep.subr.mxu0 0.0
    %102 = vmatpush1.msra.mxu0 %v39
    %103 = vmatprep.subr.mxu0 0.0
    %104 = vmatpush1.msra.mxu0 %v40
    %105 = vmatprep.subr.mxu0 0.0
    %106 = vmatpush1.msra.mxu0 %v41
    %107 = vmatprep.subr.mxu0 0.0
    %108 = vmatpush1.msra.mxu0 0.0
    %109 = vmatprep.subr.mxu0 0.0
    %110 = vmatpush1.msra.mxu0 0.0
    %111 = vmatprep.subr.mxu0 0.0
    %112 = vmatpush1.msra.mxu0 0.0
    %113 = vmatprep.subr.mxu0 0.0
    %114 = vmatpush1.msra.mxu0 0.0
    %115 = vmatprep.subr.mxu0 0.0
    %116 = vmatpush1.msra.mxu0 0.0
    %117 = vmatprep.subr.mxu0 0.0
    %118 = vmatpush1.msra.mxu0 0.0
    %119 = vmatprep.subr.mxu0 0.0
    %120 = vmatpush1.msra.mxu0 0.0
    %121 = vmatprep.subr.mxu0 0.0
    %122 = vmatpush1.msra.mxu0 0.0
    %123 = vmatprep.subr.mxu0 0.0
    %124 = vmatpush1.msra.mxu0 0.0
    %125 = vmatprep.subr.mxu0 0.0
    %126 = vmatpush1.msra.mxu0 0.0
    %127 = vmatprep.subr.mxu0 0.0
    %128 = vmatpush1.msra.mxu0 0.0
    %129 = vmatprep.subr.mxu0 0.0
    %130 = vmatpush1.msra.mxu0 0.0
    %131 = vmatprep.subr.mxu0 0.0
    %132 = vmatpush1.msra.mxu0 0.0
    %133 = vmatprep.subr.mxu0 0.0
    %134 = vmatpush1.msra.mxu0 0.0
    %135 = vmatprep.subr.mxu0 0.0
    %136 = vmatpush1.msra.mxu0 0.0
    %137 = vmatprep.subr.mxu0 0.0
    %138 = vmatpush1.msra.mxu0 0.0
    %139 = vmatprep.subr.mxu0 0.0
    %140 = vmatpush1.msra.mxu0 0.0
    %141 = vmatprep.subr.mxu0 0.0
    %142 = vmatpush1.msra.mxu0 0.0
    %143 = vmatprep.subr.mxu0 0.0
    %144 = vmatpush1.msra.mxu0 0.0
    %145 = vmatprep.subr.mxu0 0.0
    %146 = vmatpush1.msra.mxu0 0.0
    %147 = vmatprep.subr.mxu0 0.0
    %148 = vmatpush1.msra.mxu0 0.0
    %149 = vmatprep.subr.mxu0 0.0
    %150 = vmatpush1.msra.mxu0 0.0
    %151 = vmatprep.subr.mxu0 0.0
    %152 = vmatpush1.msra.mxu0 0.0
    %153 = vmatprep.subr.mxu0 0.0
    %154 = vmatpush1.msra.mxu0 0.0
    %155 = vmatprep.mubr.f32.mxu0 0.0
    %156 = vmatmul.mubr.f32.gmra.mrb[0].mxu0 %v44
    %v157 = vpop.f32.mrb[0].mxu0
    %v158 = vadd.f32 0.0, %v157
    %v159 = vpop.f32.mrb[0].mxu0
    %160 = vmatprep.mubr.f32.mxu0 0.0
    %161 = vmatmul.mubr.f32.gmra.mrb[0].mxu0 %v47
    %v162 = vpop.f32.mrb[0].mxu0
    %v163 = vadd.f32 0.0, %v162
    %v164 = vpop.f32.mrb[0].mxu0
    %165 = vmatprep.mubr.f32.mxu0 0.0
    %166 = vmatmul.mubr.f32.gmra.mrb[0].mxu0 %v50
    %v167 = vpop.f32.mrb[0].mxu0
    %v168 = vadd.f32 0.0, %v167
    %v169 = vpop.f32.mrb[0].mxu0
    %170 = vmatprep.mubr.f32.mxu0 0.0
    %171 = vmatmul.mubr.f32.gmra.mrb[0].mxu0 %v53
    %v172 = vpop.f32.mrb[0].mxu0
    %v173 = vadd.f32 0.0, %v172
    %v174 = vpop.f32.mrb[0].mxu0
    %175 = vmatprep.mubr.f32.mxu0 0.0
    %176 = vmatmul.mubr.f32.gmra.mrb[0].mxu0 %v56
    %v177 = vpop.f32.mrb[0].mxu0
    %v178 = vadd.f32 0.0, %v177
    %v179 = vpop.f32.mrb[0].mxu0
    %180 = vmatprep.mubr.f32.mxu0 0.0
    %181 = vmatmul.mubr.f32.gmra.mrb[0].mxu0 %v59
    %v182 = vpop.f32.mrb[0].mxu0
    %v183 = vadd.f32 0.0, %v182
    %v184 = vpop.f32.mrb[0].mxu0
    %185 = vmatprep.mubr.f32.mxu0 0.0
    %186 = vmatmul.mubr.f32.gmra.mrb[0].mxu0 %v62
    %v187 = vpop.f32.mrb[0].mxu0
    %v188 = vadd.f32 0.0, %v187
    %v189 = vpop.f32.mrb[0].mxu0
    %190 = vmatprep.mubr.f32.mxu0 0.0
    %191 = vmatmul.mubr.f32.gmra.mrb[0].mxu0 %v65
    %v192 = vpop.f32.mrb[0].mxu0
    %v193 = vadd.f32 0.0, %v192
    %v194 = vpop.f32.mrb[0].mxu0
    %195 = vmatprep.mubr.f32.mxu0 0.0
    %196 = vmatmul.mubr.f32.gmra.mrb[0].mxu0 %v68
    %v197 = vpop.f32.mrb[0].mxu0
    %v198 = vadd.f32 0.0, %v197
    %v199 = vpop.f32.mrb[0].mxu0
    %200 = vmatprep.mubr.f32.mxu0 0.0
    %201 = vmatmul.mubr.f32.gmra.mrb[0].mxu0 %v71
    %v202 = vpop.f32.mrb[0].mxu0
    %v203 = vadd.f32 0.0, %v202
    %v204 = vpop.f32.mrb[0].mxu0
    %205 = vmatprep.mubr.f32.mxu0 0.0
    %206 = vmatmul.mubr.f32.gmra.mrb[0].mxu0 %v74
    %v207 = vpop.f32.mrb[0].mxu0
    %v208 = vadd.f32 0.0, %v207
    %v209 = vpop.f32.mrb[0].mxu0
    %210 = vmatprep.mubr.f32.mxu0 0.0
    %211 = vmatmul.mubr.f32.gmra.mrb[0].mxu0 %v77
    %v212 = vpop.f32.mrb[0].mxu0
    %v213 = vadd.f32 0.0, %v212
    %v214 = vpop.f32.mrb[0].mxu0
    %215 = vmatprep.mubr.f32.mxu0 0.0
    %216 = vmatmul.mubr.f32.gmra.mrb[0].mxu0 %v80
    %v217 = vpop.f32.mrb[0].mxu0
    %v218 = vadd.f32 0.0, %v217
    %v219 = vpop.f32.mrb[0].mxu0
    %220 = vmatprep.mubr.f32.mxu0 0.0
    %221 = vmatmul.mubr.f32.gmra.mrb[0].mxu0 %v83
    %v222 = vpop.f32.mrb[0].mxu0
    %v223 = vadd.f32 0.0, %v222
    %v224 = vpop.f32.mrb[0].mxu0
    %225 = vmatprep.mubr.f32.mxu0 0.0
    %226 = vmatmul.mubr.f32.gmra.mrb[0].mxu0 %v86
    %v227 = vpop.f32.mrb[0].mxu0
    %v228 = vadd.f32 0.0, %v227
    %v229 = vpop.f32.mrb[0].mxu0
    %230 = vmatprep.mubr.f32.mxu0 0.0
    %231 = vmatmul.mubr.f32.gmra.mrb[0].mxu0 %v89
    %v232 = vpop.f32.mrb[0].mxu0
    %v233 = vadd.f32 0.0, %v232
    %v234 = vpop.f32.mrb[0].mxu0
    %235 = vdwg.mxu0
    %v236 = vld [vmem:[%s3] sm:$0xff]
    %v237 = vld [vmem:[%s3 + $0x8] sm:$0xff]
    %v238 = vld [vmem:[%s3 + $0x10] sm:$0xff]
    %v239 = vld [vmem:[%s3 + $0x18] sm:$0xff]
    %v240 = vld [vmem:[%s3 + $0x20] sm:$0xff]
    %v241 = vld [vmem:[%s3 + $0x28] sm:$0xff]
    %v242 = vld [vmem:[%s3 + $0x30] sm:$0xff]
    %v243 = vld [vmem:[%s3 + $0x38] sm:$0xff]
    %v244 = vld [vmem:[%s3 + $0x40] sm:$0xff]
    %v245 = vld [vmem:[%s3 + $0x48] sm:$0xff]
    %v246 = vld [vmem:[%s3 + $0x50] sm:$0xff]
    %v247 = vld [vmem:[%s3 + $0x58] sm:$0xff]
    %v248 = vld [vmem:[%s3 + $0x60] sm:$0xff]
    %v249 = vld [vmem:[%s3 + $0x68] sm:$0xff]
    %v250 = vld [vmem:[%s3 + $0x70] sm:$0xff]
    %v251 = vld [vmem:[%s3 + $0x78] sm:$0xff]
    %v252 = vld [vmem:[%s2] sm:$0x1]
    %v254 = vlaneseq
    %v255 = vshrl.u32 %v254, 7
    %v256 = vsub.s32 0, %v255
    %v257 = vrot.slane %v252, %v256
    %259 = vmatprep.subr.mxu0 0.0
    %260 = vmatpush1.msra.mxu0 %v158
    %261 = vmatprep.subr.mxu0 0.0
    %262 = vmatpush1.msra.mxu0 %v163
    %263 = vmatprep.subr.mxu0 0.0
    %264 = vmatpush1.msra.mxu0 %v168
    %265 = vmatprep.subr.mxu0 0.0
    %266 = vmatpush1.msra.mxu0 %v173
    %267 = vmatprep.subr.mxu0 0.0
    %268 = vmatpush1.msra.mxu0 %v178
    %269 = vmatprep.subr.mxu0 0.0
    %270 = vmatpush1.msra.mxu0 %v183
    %271 = vmatprep.subr.mxu0 0.0
    %272 = vmatpush1.msra.mxu0 %v188
    %273 = vmatprep.subr.mxu0 0.0
    %274 = vmatpush1.msra.mxu0 %v193
    %275 = vmatprep.subr.mxu0 0.0
    %276 = vmatpush1.msra.mxu0 %v198
    %277 = vmatprep.subr.mxu0 0.0
    %278 = vmatpush1.msra.mxu0 %v203
    %279 = vmatprep.subr.mxu0 0.0
    %280 = vmatpush1.msra.mxu0 %v208
    %281 = vmatprep.subr.mxu0 0.0
    %282 = vmatpush1.msra.mxu0 %v213
    %283 = vmatprep.subr.mxu0 0.0
    %284 = vmatpush1.msra.mxu0 %v218
    %285 = vmatprep.subr.mxu0 0.0
    %286 = vmatpush1.msra.mxu0 %v223
    %287 = vmatprep.subr.mxu0 0.0
    %288 = vmatpush1.msra.mxu0 %v228
    %289 = vmatprep.subr.mxu0 0.0
    %290 = vmatpush1.msra.mxu0 %v233
    %291 = vmatprep.subr.mxu0 0.0
    %292 = vmatpush1.msra.mxu0 0.0
    %293 = vmatprep.subr.mxu0 0.0
    %294 = vmatpush1.msra.mxu0 0.0
    %295 = vmatprep.subr.mxu0 0.0
    %296 = vmatpush1.msra.mxu0 0.0
    %297 = vmatprep.subr.mxu0 0.0
    %298 = vmatpush1.msra.mxu0 0.0
    %299 = vmatprep.subr.mxu0 0.0
    %300 = vmatpush1.msra.mxu0 0.0
    %301 = vmatprep.subr.mxu0 0.0
    %302 = vmatpush1.msra.mxu0 0.0
    %303 = vmatprep.subr.mxu0 0.0
    %304 = vmatpush1.msra.mxu0 0.0
    %305 = vmatprep.subr.mxu0 0.0
    %306 = vmatpush1.msra.mxu0 0.0
    %307 = vmatprep.subr.mxu0 0.0
    %308 = vmatpush1.msra.mxu0 0.0
    %309 = vmatprep.subr.mxu0 0.0
    %310 = vmatpush1.msra.mxu0 0.0
    %311 = vmatprep.subr.mxu0 0.0
    %312 = vmatpush1.msra.mxu0 0.0
    %313 = vmatprep.subr.mxu0 0.0
    %314 = vmatpush1.msra.mxu0 0.0
    %315 = vmatprep.subr.mxu0 0.0
    %316 = vmatpush1.msra.mxu0 0.0
    %317 = vmatprep.subr.mxu0 0.0
    %318 = vmatpush1.msra.mxu0 0.0
    %319 = vmatprep.subr.mxu0 0.0
    %320 = vmatpush1.msra.mxu0 0.0
    %321 = vmatprep.subr.mxu0 0.0
    %322 = vmatpush1.msra.mxu0 0.0
    %323 = vmatprep.mubr.f32.mxu0 0.0
    %324 = vmatmul.mubr.f32.gmra.mrb[0].mxu0 %v236
    %v325 = vpop.f32.mrb[0].mxu0
    %v326 = vadd.f32 %v257, %v325
    %v327 = vpop.f32.mrb[0].mxu0
    %328 = vmatprep.mubr.f32.mxu0 0.0
    %329 = vmatmul.mubr.f32.gmra.mrb[0].mxu0 %v237
    %v330 = vpop.f32.mrb[0].mxu0
    %v331 = vadd.f32 %v257, %v330
    %v332 = vpop.f32.mrb[0].mxu0
    %333 = vmatprep.mubr.f32.mxu0 0.0
    %334 = vmatmul.mubr.f32.gmra.mrb[0].mxu0 %v238
    %v335 = vpop.f32.mrb[0].mxu0
    %v336 = vadd.f32 %v257, %v335
    %v337 = vpop.f32.mrb[0].mxu0
    %338 = vmatprep.mubr.f32.mxu0 0.0
    %339 = vmatmul.mubr.f32.gmra.mrb[0].mxu0 %v239
    %v340 = vpop.f32.mrb[0].mxu0
    %v341 = vadd.f32 %v257, %v340
    %v342 = vpop.f32.mrb[0].mxu0
    %343 = vmatprep.mubr.f32.mxu0 0.0
    %344 = vmatmul.mubr.f32.gmra.mrb[0].mxu0 %v240
    %v345 = vpop.f32.mrb[0].mxu0
    %v346 = vadd.f32 %v257, %v345
    %v347 = vpop.f32.mrb[0].mxu0
    %348 = vmatprep.mubr.f32.mxu0 0.0
    %349 = vmatmul.mubr.f32.gmra.mrb[0].mxu0 %v241
    %v350 = vpop.f32.mrb[0].mxu0
    %v351 = vadd.f32 %v257, %v350
    %v352 = vpop.f32.mrb[0].mxu0
    %353 = vmatprep.mubr.f32.mxu0 0.0
    %354 = vmatmul.mubr.f32.gmra.mrb[0].mxu0 %v242
    %v355 = vpop.f32.mrb[0].mxu0
    %v356 = vadd.f32 %v257, %v355
    %v357 = vpop.f32.mrb[0].mxu0
    %358 = vmatprep.mubr.f32.mxu0 0.0
    %359 = vmatmul.mubr.f32.gmra.mrb[0].mxu0 %v243
    %v360 = vpop.f32.mrb[0].mxu0
    %v361 = vadd.f32 %v257, %v360
    %v362 = vpop.f32.mrb[0].mxu0
    %363 = vmatprep.mubr.f32.mxu0 0.0
    %364 = vmatmul.mubr.f32.gmra.mrb[0].mxu0 %v244
    %v365 = vpop.f32.mrb[0].mxu0
    %v366 = vadd.f32 %v257, %v365
    %v367 = vpop.f32.mrb[0].mxu0
    %368 = vmatprep.mubr.f32.mxu0 0.0
    %369 = vmatmul.mubr.f32.gmra.mrb[0].mxu0 %v245
    %v370 = vpop.f32.mrb[0].mxu0
    %v371 = vadd.f32 %v257, %v370
    %v372 = vpop.f32.mrb[0].mxu0
    %373 = vmatprep.mubr.f32.mxu0 0.0
    %374 = vmatmul.mubr.f32.gmra.mrb[0].mxu0 %v246
    %v375 = vpop.f32.mrb[0].mxu0
    %v376 = vadd.f32 %v257, %v375
    %v377 = vpop.f32.mrb[0].mxu0
    %378 = vmatprep.mubr.f32.mxu0 0.0
    %379 = vmatmul.mubr.f32.gmra.mrb[0].mxu0 %v247
    %v380 = vpop.f32.mrb[0].mxu0
    %v381 = vadd.f32 %v257, %v380
    %v382 = vpop.f32.mrb[0].mxu0
    %383 = vmatprep.mubr.f32.mxu0 0.0
    %384 = vmatmul.mubr.f32.gmra.mrb[0].mxu0 %v248
    %v385 = vpop.f32.mrb[0].mxu0
    %v386 = vadd.f32 %v257, %v385
    %v387 = vpop.f32.mrb[0].mxu0
    %388 = vmatprep.mubr.f32.mxu0 0.0
    %389 = vmatmul.mubr.f32.gmra.mrb[0].mxu0 %v249
    %v390 = vpop.f32.mrb[0].mxu0
    %v391 = vadd.f32 %v257, %v390
    %v392 = vpop.f32.mrb[0].mxu0
    %393 = vmatprep.mubr.f32.mxu0 0.0
    %394 = vmatmul.mubr.f32.gmra.mrb[0].mxu0 %v250
    %v395 = vpop.f32.mrb[0].mxu0
    %v396 = vadd.f32 %v257, %v395
    %v397 = vpop.f32.mrb[0].mxu0
    %398 = vmatprep.mubr.f32.mxu0 0.0
    %399 = vmatmul.mubr.f32.gmra.mrb[0].mxu0 %v251
    %v400 = vpop.f32.mrb[0].mxu0
    %v401 = vadd.f32 %v257, %v400
    %v402 = vpop.f32.mrb[0].mxu0
    %403 = vdwg.mxu0
    %404 = vst [vmem:[#allocation2] sm:$0xff] %v326
    %405 = vst [vmem:[#allocation2 + $0x8] sm:$0xff] %v331
    %406 = vst [vmem:[#allocation2 + $0x10] sm:$0xff] %v336
    %407 = vst [vmem:[#allocation2 + $0x18] sm:$0xff] %v341
    %408 = vst [vmem:[#allocation2 + $0x20] sm:$0xff] %v346
    %409 = vst [vmem:[#allocation2 + $0x28] sm:$0xff] %v351
    %410 = vst [vmem:[#allocation2 + $0x30] sm:$0xff] %v356
    %411 = vst [vmem:[#allocation2 + $0x38] sm:$0xff] %v361
    %412 = vst [vmem:[#allocation2 + $0x40] sm:$0xff] %v366
    %413 = vst [vmem:[#allocation2 + $0x48] sm:$0xff] %v371
    %414 = vst [vmem:[#allocation2 + $0x50] sm:$0xff] %v376
    %415 = vst [vmem:[#allocation2 + $0x58] sm:$0xff] %v381
    %416 = vst [vmem:[#allocation2 + $0x60] sm:$0xff] %v386
    %417 = vst [vmem:[#allocation2 + $0x68] sm:$0xff] %v391
    %418 = vst [vmem:[#allocation2 + $0x70] sm:$0xff] %v396
    %419 = vst [vmem:[#allocation2 + $0x78] sm:$0xff] %v401
    // Predicated region
    $region18: #{tpu_custom_call.1} parent=1 // pred_check
      _
    $region19: #{tpu_custom_call.1} parent=1 // pred_check_branch
      %421 = sbr.rel (0) target = $region21
    $region20: #{tpu_custom_call.1} parent=1 // pred_region
      %s423 = ssub.s32 2048, 2048
      %424 = vsyncadd [#allocation3], %s423
      %s425 = sshll.u32 [#allocation2], 4
      %s426 = int_to_ptr.vmem [resolvable:$true] %s425
      %431 = dma.vmem_to_hbm [thread:$0]  %s426, 2048, %s4, [#allocation3], 128, 128, 8
    $region21: #{tpu_custom_call.1} parent=1 // pred_fallthru
      _
    // Predicated region
    $region22: #{tpu_custom_call.1} parent=1 // pred_check
      _
    $region23: #{tpu_custom_call.1} parent=1 // pred_check_branch
      %433 = sbr.rel (0) target = $region25
    $region24: #{tpu_custom_call.1} parent=1 // pred_region
      %434 = dma.done [#allocation3], 2048
    $region25: #{tpu_custom_call.1} parent=1 // pred_fallthru
      _
    %435 = vsyncpa [#allocation3], 1

</llo_original>
